<compile_context>
chip_gen: v7x
topology: tpu7x:2x2x1
jax: 0.10.0
libtpu: 0.0.40
codegen_flags: <defaults>
</compile_context>

<pallas_src>
import functools

import jax
import jax.numpy as jnp
from jax import lax
from jax.experimental import pallas as pl
from jax.experimental.pallas import tpu as pltpu

_EPS = 1e-5


def _withbias_ln_kernel(x_ref, w_ref, b_ref, o_ref, *, inv_c):
    # x_ref/o_ref: (C, T) (batch dim squeezed by BlockSpec); w_ref/b_ref: (C, 1).
    xf = x_ref[...].astype(jnp.float32)
    s1 = jnp.sum(xf, axis=0, keepdims=True)          # (1, T)
    s2 = jnp.sum(xf * xf, axis=0, keepdims=True)     # (1, T)
    mu = s1 * inv_c
    var = jnp.maximum(s2 * inv_c - mu * mu, 0.0)     # unbiased=False; guard cancellation
    rstd = lax.rsqrt(var + _EPS)                     # EUP slot (free-ish)
    shift = mu * rstd                                # (1, T)
    w = w_ref[...].astype(jnp.float32)               # (C, 1)
    b = b_ref[...].astype(jnp.float32)               # (C, 1)
    # Re-read the block for the normalize/affine step: keeps the f32 copy's live
    # range short (a second vld of the resident VMEM block is nearly free).
    x2 = x_ref[...].astype(jnp.float32)
    o_ref[...] = ((x2 * rstd - shift) * w + b).astype(o_ref.dtype)


def _biasfree_ln_kernel(x_ref, w_ref, o_ref, *, inv_c):
    xf = x_ref[...].astype(jnp.float32)
    s1 = jnp.sum(xf, axis=0, keepdims=True)
    s2 = jnp.sum(xf * xf, axis=0, keepdims=True)
    mu = s1 * inv_c
    var = jnp.maximum(s2 * inv_c - mu * mu, 0.0)     # unbiased=False
    rstd = lax.rsqrt(var + _EPS)
    w = w_ref[...].astype(jnp.float32)
    x2 = x_ref[...].astype(jnp.float32)
    # NOTE: BiasFree variant divides x (NOT x - mu) by sqrt(var + eps).
    o_ref[...] = ((x2 * rstd) * w).astype(o_ref.dtype)


@functools.lru_cache(maxsize=1)
def _vmem_budget():
    """Return (vmem_limit_bytes, usable_buffer_budget_bytes), generation-aware."""
    try:
        cap = int(pltpu.get_tpu_info().vmem_capacity_bytes)
    except Exception:
        cap = 64 << 20                       # conservative: v7x has 64 MiB / TC
    if cap >= (100 << 20):                   # v5e / v6e: 128 MiB VMEM
        limit = 96 << 20
    else:                                    # v7x: leave headroom for internal scratch
        limit = 44 << 20
    return limit, int(0.72 * limit)


def _pick_tile_hw(hw, c, itemsize, budget_bytes, want_steps):
    """Lane tile: multiple of 128, sized so 2x(in) + 2x(out) double-buffers plus
    ~2 block-sized f32 temps fit in the VMEM budget; optionally capped so the hw
    axis contributes >= want_steps grid steps (keeps both v7x TensorCores busy)."""
    if hw <= 128:
        return int(hw)                       # full-extent last dim is a legal block dim
    hw_pad = -(-hw // 128) * 128
    denom = c * (4 * itemsize + 8)           # 4 I/O buffers + ~2 f32 temps per lane
    t = budget_bytes // max(1, denom)
    t = max(128, (t // 128) * 128)
    t = min(t, hw_pad)
    if want_steps > 1:
        per = -(-hw // want_steps)
        per = -(-per // 128) * 128
        t = min(t, max(128, per))
    return int(t)


@functools.partial(jax.jit, static_argnames=("layernorm_type",))
def layernorm_nchw(x, weight, bias, layernorm_type="WithBias"):
    """Equivalent of LayerNorm(dim, LayerNorm_type).forward(x) for NCHW x."""
    b, c, h, w = x.shape
    hw = h * w
    x3 = x.reshape(b, c, hw)                 # metadata-only reshape
    itemsize = jnp.dtype(x.dtype).itemsize

    vmem_limit, budget = _vmem_budget()
    want_steps = 4 if b < 2 else 1           # batch-1: force >=4 parallel hw steps (megacore)
    tile = _pick_tile_hw(hw, c, itemsize, budget, want_steps)
    grid = (b, pl.cdiv(hw, tile))

    # NOTE: for very small C (< 8 f32 / < 16 bf16) the (C, tile) block pads the
    # sublane axis; typical production channel counts (48/96/192/384) are unaffected.
    x_spec = pl.BlockSpec((pl.Squeezed(), c, tile), lambda i, j: (i, 0, j))
    o_spec = pl.BlockSpec((pl.Squeezed(), c, tile), lambda i, j: (i, 0, j))
    p_spec = pl.BlockSpec((c, 1), lambda i, j: (0, 0))

    w2 = weight.reshape(c, 1)
    inv_c = 1.0 / c

    n_elem = b * c * hw
    cost = pl.CostEstimate(
        flops=8 * n_elem,
        transcendentals=b * hw,
        bytes_accessed=2 * n_elem * itemsize,
    )
    cparams = pltpu.CompilerParams(
        dimension_semantics=("parallel", "parallel"),
        vmem_limit_bytes=vmem_limit,
    )

    # TODO(synk): on v7x with bf16 I/O the two channel reductions could be offloaded
    # to the idle MXU via a ones((1, C)) matmul; kept on the VPU here so the f32
    # stats are not truncated by the default-precision MXU pass.

    if layernorm_type == "BiasFree":
        y3 = pl.pallas_call(
            functools.partial(_biasfree_ln_kernel, inv_c=inv_c),
            out_shape=jax.ShapeDtypeStruct((b, c, hw), x.dtype),
            grid_spec=pltpu.PrefetchScalarGridSpec(
                num_scalar_prefetch=0,
                grid=grid,
                in_specs=[x_spec, p_spec],
                out_specs=o_spec,
            ),
            compiler_params=cparams,
            cost_estimate=cost,
        )(x3, w2)
    else:
        b2 = bias.reshape(c, 1)
        y3 = pl.pallas_call(
            functools.partial(_withbias_ln_kernel, inv_c=inv_c),
            out_shape=jax.ShapeDtypeStruct((b, c, hw), x.dtype),
            grid_spec=pltpu.PrefetchScalarGridSpec(
                num_scalar_prefetch=0,
                grid=grid,
                in_specs=[x_spec, p_spec, p_spec],
                out_specs=o_spec,
            ),
            compiler_params=cparams,
            cost_estimate=cost,
        )(x3, w2, b2)

    return y3.reshape(b, c, h, w)


def _reference_nchw(x, weight, bias, layernorm_type="WithBias"):
    b, c, h, w = x.shape
    x3 = jnp.transpose(x, (0, 2, 3, 1)).reshape(b, h * w, c).astype(jnp.float32)
    mu = jnp.mean(x3, axis=-1, keepdims=True)
    var = jnp.mean((x3 - mu) ** 2, axis=-1, keepdims=True)
    if layernorm_type == "BiasFree":
        y3 = x3 / jnp.sqrt(var + _EPS) * weight
    else:
        y3 = (x3 - mu) / jnp.sqrt(var + _EPS) * weight + bias
    return jnp.transpose(y3.reshape(b, h, w, c), (0, 3, 1, 2)).astype(x.dtype)


if __name__ == "__main__":
    key = jax.random.PRNGKey(0)
    B, C, H, W = 2, 4, 16, 16
    x = jax.random.normal(key, (B, C, H, W), dtype=jnp.float32)

    # Deterministic parameter init (matches nn.Parameter init in __init__).
    weight = jnp.ones((C,), dtype=jnp.float32)
    bias = jnp.zeros((C,), dtype=jnp.float32)

    # WithBias variant (default branch of LayerNorm.__init__)
    out_wb = layernorm_nchw(x, weight, bias, layernorm_type="WithBias")
    jax.block_until_ready(out_wb)
    ref_wb = _reference_nchw(x, weight, bias, "WithBias")

    # BiasFree variant
    out_bf = layernorm_nchw(x, weight, bias, layernorm_type="BiasFree")
    jax.block_until_ready(out_bf)
    ref_bf = _reference_nchw(x, weight, bias, "BiasFree")

    # Non-128-aligned spatial size exercises the cdiv / tail-lane path.
    x_odd = jax.random.normal(key, (B, C, 15, 15), dtype=jnp.float32)
    out_odd = layernorm_nchw(x_odd, weight, bias, layernorm_type="WithBias")
    jax.block_until_ready(out_odd)
    ref_odd = _reference_nchw(x_odd, weight, bias, "WithBias")

    # Batch-1 case exercises the megacore tile split (>=4 hw grid steps) and uses
    # non-trivial affine params.
    C1 = 8
    kx, kw, kb = jax.random.split(jax.random.PRNGKey(1), 3)
    x_b1 = jax.random.normal(kx, (1, C1, 40, 40), dtype=jnp.float32)
    w1 = 1.0 + 0.1 * jax.random.normal(kw, (C1,), dtype=jnp.float32)
    b1 = 0.1 * jax.random.normal(kb, (C1,), dtype=jnp.float32)
    out_b1 = layernorm_nchw(x_b1, w1, b1, layernorm_type="WithBias")
    jax.block_until_ready(out_b1)
    ref_b1 = _reference_nchw(x_b1, w1, b1, "WithBias")

    assert out_wb.shape == (B, C, H, W)
    assert jnp.allclose(out_wb, ref_wb, atol=1e-5, rtol=1e-5)
    assert jnp.allclose(out_bf, ref_bf, atol=1e-5, rtol=1e-5)
    assert jnp.allclose(out_odd, ref_odd, atol=1e-5, rtol=1e-5)
    assert jnp.allclose(out_b1, ref_b1, atol=1e-5, rtol=1e-5)
    print("KERNEL_OK")
</pallas_src>

<mosaic_0001>
module attributes {stable_mosaic.version = 11 : i64} {
  func.func @_withbias_ln_kernel(%arg0: i32, %arg1: i32, %arg2: memref<1x4x256xf32, #tpu.memory_space<vmem>>, %arg3: memref<4x1xf32, #tpu.memory_space<vmem>>, %arg4: memref<4x1xf32, #tpu.memory_space<vmem>>, %arg5: memref<1x4x256xf32, #tpu.memory_space<vmem>>) attributes {dimension_semantics = [#tpu.dimension_semantics<parallel>, #tpu.dimension_semantics<parallel>], iteration_bounds = array<i64: 2, 1>, scalar_prefetch = 0 : i64, scratch_operands = 0 : i64, tpu.core_type = #tpu.core_type<tc>, window_params = [{transform_indices = @transform_0, window_bounds = array<i64: 1, 4, 256>}, {pipeline_mode = #tpu.pipeline_mode<synchronous>, transform_indices = @transform_1, window_bounds = array<i64: 4, 1>}, {pipeline_mode = #tpu.pipeline_mode<synchronous>, transform_indices = @transform_2, window_bounds = array<i64: 4, 1>}, {transform_indices = @transform_3, window_bounds = array<i64: 1, 4, 256>}]} {
    %c0 = arith.constant 0 : index
    %c0_0 = arith.constant 0 : index
    %c0_1 = arith.constant 0 : index
    %0 = vector.load %arg2[%c0, %c0_0, %c0_1] : memref<1x4x256xf32, #tpu.memory_space<vmem>>, vector<1x4x256xf32>
    %1 = vector.shape_cast %0 : vector<1x4x256xf32> to vector<4x256xf32>
    %cst = arith.constant dense<0.000000e+00> : vector<256xf32>
    %2 = vector.multi_reduction <add>, %1, %cst [0] : vector<4x256xf32> to vector<256xf32>
    %3 = vector.shape_cast %2 : vector<256xf32> to vector<1x256xf32>
    %4 = arith.mulf %1, %1 : vector<4x256xf32>
    %cst_2 = arith.constant dense<0.000000e+00> : vector<256xf32>
    %5 = vector.multi_reduction <add>, %4, %cst_2 [0] : vector<4x256xf32> to vector<256xf32>
    %6 = vector.shape_cast %5 : vector<256xf32> to vector<1x256xf32>
    %cst_3 = arith.constant 2.500000e-01 : f32
    %7 = vector.broadcast %cst_3 : f32 to vector<1x256xf32>
    %8 = arith.mulf %3, %7 : vector<1x256xf32>
    %cst_4 = arith.constant 2.500000e-01 : f32
    %9 = vector.broadcast %cst_4 : f32 to vector<1x256xf32>
    %10 = arith.mulf %6, %9 : vector<1x256xf32>
    %11 = arith.mulf %8, %8 : vector<1x256xf32>
    %12 = arith.subf %10, %11 : vector<1x256xf32>
    %cst_5 = arith.constant 0.000000e+00 : f32
    %13 = vector.broadcast %cst_5 : f32 to vector<1x256xf32>
    %14 = arith.maximumf %12, %13 : vector<1x256xf32>
    %cst_6 = arith.constant 9.99999974E-6 : f32
    %15 = vector.broadcast %cst_6 : f32 to vector<1x256xf32>
    %16 = arith.addf %14, %15 : vector<1x256xf32>
    %17 = math.rsqrt %16 : vector<1x256xf32>
    %18 = arith.mulf %8, %17 : vector<1x256xf32>
    %c0_7 = arith.constant 0 : index
    %c0_8 = arith.constant 0 : index
    %19 = vector.load %arg3[%c0_7, %c0_8] : memref<4x1xf32, #tpu.memory_space<vmem>>, vector<4x1xf32>
    %c0_9 = arith.constant 0 : index
    %c0_10 = arith.constant 0 : index
    %20 = vector.load %arg4[%c0_9, %c0_10] : memref<4x1xf32, #tpu.memory_space<vmem>>, vector<4x1xf32>
    %c0_11 = arith.constant 0 : index
    %c0_12 = arith.constant 0 : index
    %c0_13 = arith.constant 0 : index
    %21 = vector.load %arg2[%c0_11, %c0_12, %c0_13] : memref<1x4x256xf32, #tpu.memory_space<vmem>>, vector<1x4x256xf32>
    %22 = vector.shape_cast %21 : vector<1x4x256xf32> to vector<4x256xf32>
    %23 = vector.broadcast %17 : vector<1x256xf32> to vector<4x256xf32>
    %24 = arith.mulf %22, %23 : vector<4x256xf32>
    %25 = vector.broadcast %18 : vector<1x256xf32> to vector<4x256xf32>
    %26 = arith.subf %24, %25 : vector<4x256xf32>
    %27 = vector.broadcast %19 : vector<4x1xf32> to vector<4x256xf32>
    %28 = arith.mulf %26, %27 : vector<4x256xf32>
    %29 = vector.broadcast %20 : vector<4x1xf32> to vector<4x256xf32>
    %30 = arith.addf %28, %29 : vector<4x256xf32>
    %c0_14 = arith.constant 0 : index
    %c0_15 = arith.constant 0 : index
    %c0_16 = arith.constant 0 : index
    %31 = vector.load %arg5[%c0_14, %c0_15, %c0_16] : memref<1x4x256xf32, #tpu.memory_space<vmem>>, vector<1x4x256xf32>
    %32 = vector.shape_cast %31 : vector<1x4x256xf32> to vector<4x256xf32>
    %33 = vector.shape_cast %30 : vector<4x256xf32> to vector<1x4x256xf32>
    tpu.vector_store %arg5[%c0_14, %c0_15, %c0_16], %33 {strides = array<i32>} : memref<1x4x256xf32, #tpu.memory_space<vmem>>, vector<1x4x256xf32>,
    return
  }
  func.func @transform_0(%arg0: i32, %arg1: i32) -> (i32, i32, i32) {
    %c0_i32 = arith.constant 0 : i32
    %c0_i32_0 = arith.constant 0 : i32
    return %arg0, %c0_i32, %arg1 : i32, i32, i32
  }
  func.func @transform_1(%arg0: i32, %arg1: i32) -> (i32, i32) {
    %c0_i32 = arith.constant 0 : i32
    %c0_i32_0 = arith.constant 0 : i32
    %c0_i32_1 = arith.constant 0 : i32
    return %c0_i32, %c0_i32_0 : i32, i32
  }
  func.func @transform_2(%arg0: i32, %arg1: i32) -> (i32, i32) {
    %c0_i32 = arith.constant 0 : i32
    %c0_i32_0 = arith.constant 0 : i32
    %c0_i32_1 = arith.constant 0 : i32
    return %c0_i32, %c0_i32_0 : i32, i32
  }
  func.func @transform_3(%arg0: i32, %arg1: i32) -> (i32, i32, i32) {
    %c0_i32 = arith.constant 0 : i32
    %c0_i32_0 = arith.constant 0 : i32
    return %arg0, %c0_i32, %arg1 : i32, i32, i32
  }
}

</mosaic_0001>

<llo_original>
// kernel: layernorm_nchw.1
$region0: #{layernorm_nchw.1}
  #allocation0 [shape = 'u32[]', space=smem, size = 0x4, offset = 0x4, fixed_abs, tag = 'smem constant byte address 0x4 - core index']
  #allocation1 [shape = 'u32[144,128]{1,0:T(1,128)}', space=vmem, size = 0x12000, scoped, tag = 'internal scratch']
  %s0 = inlined_call_operand.vmem [shape: f32[2,4,256], index: 0, kind: input, shape index: {}]
  %s1 = inlined_call_operand.vmem [shape: f32[4,1], index: 1, kind: input, shape index: {}]
  %s2 = inlined_call_operand.vmem [shape: f32[4,1], index: 2, kind: input, shape index: {}]
  %s3 = inlined_call_operand.vmem [shape: f32[2,4,256], index: 3, kind: output, shape index: {}]
  %s4 = sld [smem:[#allocation0]]
  $region45: #{layernorm_nchw.1} parent=0
    _
  %s6 = ssub.s32 1, %s4
  %s7 = scalar_select 0, %s6, %s4
  loop: start=0, step=1, limit=4
  $region2: #{layernorm_nchw.1} parent=0 // loop_pre_header
    _
  $region3: #{layernorm_nchw.1} parent=0 // loop_header
    %s9 = sphi 0, %s13
    %p10 = scmp.ge.s32.totalorder %s9, 4
    %s16 = sphi 0, %s28
    %s17 = sphi 0, %s24
    %s18 = sphi 0, %s16
    %s19 = sphi 0, %s17
    %s20 = sphi 0, %s18
    %s21 = sphi 0, %s19
    %s33 = sphi 0, %s35
    %s36 = sphi 0, %s33
    %s37 = sphi 0, %s36
    %s53 = sphi 0, %s37
    %s57 = sphi 0, %s57
    %s59 = sphi 0, %s57
    %s60 = sphi 0, %s59
    %s74 = sphi 0, %s60
    %s78 = sphi 0, %s78
    %s80 = sphi 0, %s78
    %s81 = sphi 0, %s80
    %s95 = sphi 0, %s81
    %s103 = sphi 0, %s105
    %s106 = sphi 0, %s103
    %s107 = sphi 0, %s106
    %s123 = sphi 0, %s107
  $region4: #{layernorm_nchw.1} parent=0 // loop_header_branch
    %12 = sbr.rel (%p10) target = $region8
  $region5: #{layernorm_nchw.1} parent=0 // loop_body
    %s14 = ssub.s32 %s9, 1
    %s15 = ssub.s32 %s9, 2
    %s22 = sadd.s32 1, %s17
    %p23 = scmp.ge.s32.totalorder %s22, 1
    %s24 = scalar_select %p23, 0, %s22
    %s25 = sadd.s32 1, %s16
    %s26 = scalar_select %p23, %s25, %s16
    %p27 = scmp.ge.s32.totalorder %s26, 2
    %s28 = scalar_select %p27, 0, %s26
    %s29 = ssub.s32 %s16, %s28
    %s30 = ssub.s32 %s17, %s24
    %s31 = sor.u32 %s29, %s30
    %p32 = scmp.eq.s32.totalorder %s31, 0
    %s34 = sadd.s32 %s33, 1
    %s35 = scalar_select %p32, %s33, %s34
    %p38 = pneg %p32
    %p39 = scmp.eq.s32.totalorder %s9, 1
    %p40 = por %p38, %p39
    %p41 = scmp.ne.s32.totalorder %s33, %s36
    %p42 = scmp.eq.s32.totalorder %s9, 0
    %p43 = por %p41, %p42
    %p44 = scmp.ne.s32.totalorder %s33, %s36
    %p45 = scmp.eq.s32.totalorder %s14, 1
    %p46 = por %p44, %p45
    %p47 = scmp.ne.s32.totalorder %s36, %s37
    %p48 = scmp.eq.s32.totalorder %s14, 0
    %p49 = por %p47, %p48
    %p50 = scmp.ne.s32.totalorder %s36, %s37
    %p51 = scmp.eq.s32.totalorder %s15, 1
    %p52 = por %p50, %p51
    %p54 = scmp.ne.s32.totalorder %s37, %s53
    %p55 = scmp.eq.s32.totalorder %s15, 0
    %p56 = por %p54, %p55
    %s58 = sadd.s32 %s57, 1
    %p61 = scmp.eq.s32.totalorder %s9, 1
    %p62 = scmp.ne.s32.totalorder %s57, %s59
    %p63 = scmp.eq.s32.totalorder %s9, 0
    %p64 = por %p62, %p63
    %p65 = scmp.ne.s32.totalorder %s57, %s59
    %p66 = scmp.eq.s32.totalorder %s14, 1
    %p67 = por %p65, %p66
    %p68 = scmp.ne.s32.totalorder %s59, %s60
    %p69 = scmp.eq.s32.totalorder %s14, 0
    %p70 = por %p68, %p69
    %p71 = scmp.ne.s32.totalorder %s59, %s60
    %p72 = scmp.eq.s32.totalorder %s15, 1
    %p73 = por %p71, %p72
    %p75 = scmp.ne.s32.totalorder %s60, %s74
    %p76 = scmp.eq.s32.totalorder %s15, 0
    %p77 = por %p75, %p76
    %s79 = sadd.s32 %s78, 1
    %p82 = scmp.eq.s32.totalorder %s9, 1
    %p83 = scmp.ne.s32.totalorder %s78, %s80
    %p84 = scmp.eq.s32.totalorder %s9, 0
    %p85 = por %p83, %p84
    %p86 = scmp.ne.s32.totalorder %s78, %s80
    %p87 = scmp.eq.s32.totalorder %s14, 1
    %p88 = por %p86, %p87
    %p89 = scmp.ne.s32.totalorder %s80, %s81
    %p90 = scmp.eq.s32.totalorder %s14, 0
    %p91 = por %p89, %p90
    %p92 = scmp.ne.s32.totalorder %s80, %s81
    %p93 = scmp.eq.s32.totalorder %s15, 1
    %p94 = por %p92, %p93
    %p96 = scmp.ne.s32.totalorder %s81, %s95
    %p97 = scmp.eq.s32.totalorder %s15, 0
    %p98 = por %p96, %p97
    %s99 = ssub.s32 %s16, %s28
    %s100 = ssub.s32 %s17, %s24
    %s101 = sor.u32 %s99, %s100
    %p102 = scmp.eq.s32.totalorder %s101, 0
    %s104 = sadd.s32 %s103, 1
    %s105 = scalar_select %p102, %s103, %s104
    %p108 = pneg %p102
    %p109 = scmp.eq.s32.totalorder %s9, 1
    %p110 = por %p108, %p109
    %p111 = scmp.ne.s32.totalorder %s103, %s106
    %p112 = scmp.eq.s32.totalorder %s9, 0
    %p113 = por %p111, %p112
    %p114 = scmp.ne.s32.totalorder %s103, %s106
    %p115 = scmp.eq.s32.totalorder %s14, 1
    %p116 = por %p114, %p115
    %p117 = scmp.ne.s32.totalorder %s106, %s107
    %p118 = scmp.eq.s32.totalorder %s14, 0
    %p119 = por %p117, %p118
    %p120 = scmp.ne.s32.totalorder %s106, %s107
    %p121 = scmp.eq.s32.totalorder %s15, 1
    %p122 = por %p120, %p121
    %p124 = scmp.ne.s32.totalorder %s107, %s123
    %p125 = scmp.eq.s32.totalorder %s15, 0
    %p126 = por %p124, %p125
    %p127 = scmp.le.s32.totalorder 1, %s9
    %p128 = scmp.lt.s32.totalorder %s9, 3
    %p129 = pnand %p127, %p128
    %p130 = pneg %p129
    // Predicated region
    $region9: #{layernorm_nchw.1} parent=5 // pred_check
      _
    $region10: #{layernorm_nchw.1} parent=5 // pred_check_branch
      %132 = sbr.rel (%p129) target = $region12
    $region11: #{layernorm_nchw.1} parent=5 // pred_region
      %s133 = ssub.s32 %s9, 1
      // Predicated region
      $region13: #{layernorm_nchw.1} parent=11 // pred_check
        %p134 = pneg %p70
      $region14: #{layernorm_nchw.1} parent=11 // pred_check_branch
        %136 = sbr.rel (%p134) target = $region16
      $region15: #{layernorm_nchw.1} parent=11 // pred_region
        _
      $region16: #{layernorm_nchw.1} parent=11 // pred_fallthru
        _
      // Predicated region
      $region17: #{layernorm_nchw.1} parent=11 // pred_check
        %p137 = pneg %p91
      $region18: #{layernorm_nchw.1} parent=11 // pred_check_branch
        %139 = sbr.rel (%p137) target = $region20
      $region19: #{layernorm_nchw.1} parent=11 // pred_region
        _
      $region20: #{layernorm_nchw.1} parent=11 // pred_fallthru
        _
    $region12: #{layernorm_nchw.1} parent=5 // pred_fallthru
      _
    %p140 = scmp.lt.s32.totalorder %s9, 2
    // Predicated region
    $region21: #{layernorm_nchw.1} parent=5 // pred_check
      %p141 = pneg %p140
    $region22: #{layernorm_nchw.1} parent=5 // pred_check_branch
      %143 = sbr.rel (%p141) target = $region24
    $region23: #{layernorm_nchw.1} parent=5 // pred_region
      // Predicated region
      $region25: #{layernorm_nchw.1} parent=23 // pred_check
        %p144 = pneg %p43
      $region26: #{layernorm_nchw.1} parent=23 // pred_check_branch
        %146 = sbr.rel (%p144) target = $region28
      $region27: #{layernorm_nchw.1} parent=23 // pred_region
        %s147 = smul.u32 2, %s17
        %p148 = scmp.lt.s32.totalorder %s16, 1
        %s149 = scalar_select %p148, %s16, 1
        %p150 = scmp.lt.s32.totalorder %s147, 1
        %s151 = scalar_select %p150, %s147, 1
        %s152 = smul.addr %s149, 2
        %s153 = sadd.s32 %s151, %s152
        %s154 = smul.addr %s153, 4
        %s155 = scalar_lea.vmem %s0, %s154
        %s156 = smul.u32 2, %s17
      $region28: #{layernorm_nchw.1} parent=23 // pred_fallthru
        _
    $region24: #{layernorm_nchw.1} parent=5 // pred_fallthru
      _
    %p157 = scmp.le.s32.totalorder 1, %s9
    %p158 = scmp.lt.s32.totalorder %s9, 3
    %p159 = pnand %p157, %p158
    %p160 = pneg %p159
    // Predicated region
    $region29: #{layernorm_nchw.1} parent=5 // pred_check
      _
    $region30: #{layernorm_nchw.1} parent=5 // pred_check_branch
      %162 = sbr.rel (%p159) target = $region32
    $region31: #{layernorm_nchw.1} parent=5 // pred_region
      %s163 = ssub.s32 %s9, 1
      %s164 = smul.u32 2, %s19
      %p165 = scmp.lt.s32.totalorder %s18, 1
      %s166 = scalar_select %p165, %s18, 1
      %p167 = scmp.lt.s32.totalorder %s164, 1
      %s168 = scalar_select %p167, %s164, 1
      %s169 = smul.addr %s166, 2
      %s170 = sadd.s32 %s168, %s169
      %s171 = smul.addr %s170, 4
      %s172 = scalar_lea.vmem %s0, %s171
      %p173 = pneg %p49
      %p174 = pneg %p46
      %p175 = pneg %p70
      %p176 = pneg %p67
      %p177 = pneg %p91
      %p178 = pneg %p88
      %p179 = pneg %p119
      %p180 = pneg %p116
      %s181 = smul.u32 2, %s19
      %p182 = scmp.lt.s32.totalorder %s18, 1
      %s183 = scalar_select %p182, %s18, 1
      %p184 = scmp.lt.s32.totalorder %s181, 1
      %s185 = scalar_select %p184, %s181, 1
      %s186 = smul.addr %s183, 2
      %s187 = sadd.s32 %s185, %s186
      %s188 = smul.addr %s187, 4
      %s189 = scalar_lea.vmem %s3, %s188
      %s190 = smul.u32 2, %s19
      %p191 = scmp.lt.s32.totalorder %s18, 1
      %s192 = scalar_select %p191, %s18, 1
      %p193 = scmp.lt.s32.totalorder %s190, 1
      %s194 = scalar_select %p193, %s190, 1
      %s195 = smul.addr %s192, 2
      %s196 = sadd.s32 %s194, %s195
      %s197 = smul.addr %s196, 4
      %s198 = scalar_lea.vmem %s0, %s197
      %s199 = smul.u32 2, %s19
      %s200 = smul.u32 2, %s19
      %p201 = scmp.lt.s32.totalorder %s18, 1
      %s202 = scalar_select %p201, %s18, 1
      %p203 = scmp.lt.s32.totalorder %s200, 1
      %s204 = scalar_select %p203, %s200, 1
      %s205 = smul.addr %s202, 2
      %s206 = sadd.s32 %s204, %s205
      %s207 = smul.addr %s206, 4
      %s208 = scalar_lea.vmem %s3, %s207
      %s209 = smul.u32 2, %s19
      %v210 = vld [vmem:[%s198] sm:$0xff]
      %v212 = vcombine.high %v210, %v210
      %vm214 = vcmask 1043456
      %v215 = vsel %vm214, %v210, 0.0
      %v216 = vrot.slane %v215, 4
      %v217 = vadd.f32 %v215, %v216
      %v218 = vrot.slane %v217, 2
      %v219 = vadd.f32 %v217, %v218
      %v220 = vrot.slane %v219, 1
      %v221 = vadd.f32 %v219, %v220
      %v222 = vsel %vm214, %v212, 0.0
      %v223 = vrot.slane %v222, 4
      %v224 = vadd.f32 %v222, %v223
      %v225 = vrot.slane %v224, 2
      %v226 = vadd.f32 %v224, %v225
      %v227 = vrot.slane %v226, 1
      %v228 = vadd.f32 %v226, %v227
      %v229 = vmul.f32 %v210, %v210
      %v231 = vcombine.high %v229, %v229
      %v233 = vsel %vm214, %v229, 0.0
      %v234 = vrot.slane %v233, 4
      %v235 = vadd.f32 %v233, %v234
      %v236 = vrot.slane %v235, 2
      %v237 = vadd.f32 %v235, %v236
      %v238 = vrot.slane %v237, 1
      %v239 = vadd.f32 %v237, %v238
      %v240 = vsel %vm214, %v231, 0.0
      %v241 = vrot.slane %v240, 4
      %v242 = vadd.f32 %v240, %v241
      %v243 = vrot.slane %v242, 2
      %v244 = vadd.f32 %v242, %v243
      %v245 = vrot.slane %v244, 1
      %v246 = vadd.f32 %v244, %v245
      %v247 = vmul.f32 %v221, 0.25
      %v248 = vmul.f32 %v228, 0.25
      %v249 = vmul.f32 %v239, 0.25
      %v250 = vmul.f32 %v246, 0.25
      %v251 = vmul.f32 %v247, %v247
      %v252 = vmul.f32 %v248, %v248
      %v253 = vsub.f32 %v249, %v251
      %v254 = vsub.f32 %v250, %v252
      %v255 = vmax.f32 %v253, 0.0
      %v256 = vmax.f32 %v254, 0.0
      %v257 = vadd.f32 %v255, 1e-05
      %v258 = vadd.f32 %v256, 1e-05
      %v259 = vrsqrt.pop %v257
      %v260 = vrsqrt.pop %v258
      %v261 = vmul.f32 %v247, %v259
      %v262 = vmul.f32 %v248, %v260
      %v263 = vld [vmem:[%s1] sm:$0xf]
      %v264 = vld [vmem:[%s2] sm:$0xf]
      %v267 = vcombine.low %v259, %v260
      %v269 = vmul.f32 %v210, %v267
      %v272 = vcombine.low %v261, %v262
      %v274 = vsub.f32 %v269, %v272
      %276 = vset.pattern.permute.xlu0 0
      %277 = vperm.xlu0 %276, %v263
      %v278 = vpop.permute.xlu0 %277
      %v280 = vunpack.c.l.s4 839922192
      %v281 = vunpack.c.0.s8 %v280
      %v282 = vlaneseq
      %v283 = vshrl.u32 %v282, 7
      %v284 = vsub.s32 %v281, %v283
      %v285 = vrot.slane %v278, %v284
      %v287 = vmul.f32 %v274, %v285
      %289 = vset.pattern.permute.xlu0 0
      %290 = vperm.xlu0 %289, %v264
      %v291 = vpop.permute.xlu0 %290
      %v293 = vunpack.c.l.s4 839922192
      %v294 = vunpack.c.0.s8 %v293
      %v295 = vlaneseq
      %v296 = vshrl.u32 %v295, 7
      %v297 = vsub.s32 %v294, %v296
      %v298 = vrot.slane %v291, %v297
      %v300 = vadd.f32 %v287, %v298
      %301 = vst [vmem:[%s208] sm:$0xff] %v300
      %s302 = smul.u32 2, %s19
      %p303 = scmp.lt.s32.totalorder %s18, 1
      %s304 = scalar_select %p303, %s18, 1
      %p305 = scmp.lt.s32.totalorder %s302, 1
      %s306 = scalar_select %p305, %s302, 1
      %s307 = smul.addr %s304, 2
      %s308 = sadd.s32 %s306, %s307
      %s309 = smul.addr %s308, 4
      %s310 = scalar_lea.vmem %s3, %s309
      // Predicated region
      $region33: #{layernorm_nchw.1} parent=31 // pred_check
        %p311 = pneg %p116
      $region34: #{layernorm_nchw.1} parent=31 // pred_check_branch
        %313 = sbr.rel (%p311) target = $region36
      $region35: #{layernorm_nchw.1} parent=31 // pred_region
        %s314 = smul.u32 2, %s19
      $region36: #{layernorm_nchw.1} parent=31 // pred_fallthru
        _
    $region32: #{layernorm_nchw.1} parent=5 // pred_fallthru
      _
    %p315 = scmp.le.s32.totalorder 2, %s9
    // Predicated region
    $region37: #{layernorm_nchw.1} parent=5 // pred_check
      %p316 = pneg %p315
    $region38: #{layernorm_nchw.1} parent=5 // pred_check_branch
      %318 = sbr.rel (%p316) target = $region40
    $region39: #{layernorm_nchw.1} parent=5 // pred_region
      %s319 = ssub.s32 %s9, 2
      // Predicated region
      $region41: #{layernorm_nchw.1} parent=39 // pred_check
        %p320 = pneg %p122
      $region42: #{layernorm_nchw.1} parent=39 // pred_check_branch
        %322 = sbr.rel (%p320) target = $region44
      $region43: #{layernorm_nchw.1} parent=39 // pred_region
        %s323 = smul.u32 2, %s21
        %p324 = scmp.lt.s32.totalorder %s20, 1
        %s325 = scalar_select %p324, %s20, 1
        %p326 = scmp.lt.s32.totalorder %s323, 1
        %s327 = scalar_select %p326, %s323, 1
        %s328 = smul.addr %s325, 2
        %s329 = sadd.s32 %s327, %s328
        %s330 = smul.addr %s329, 4
        %s331 = scalar_lea.vmem %s3, %s330
      $region44: #{layernorm_nchw.1} parent=39 // pred_fallthru
        _
    $region40: #{layernorm_nchw.1} parent=5 // pred_fallthru
      _
  $region6: #{layernorm_nchw.1} parent=0 // loop_footer
    %s13 = sadd.s32 1, %s9
  $region7: #{layernorm_nchw.1} parent=0 // loop_footer_branch
    %8 = sbr.rel target = $region3
  $region8: #{layernorm_nchw.1} parent=0 // loop_exit
    _

</llo_original>
